<compile_context>
chip_gen: v7x
topology: tpu7x:2x2x1
jax: 0.10.0
libtpu: 0.0.40
codegen_flags: <defaults>
</compile_context>

<pallas_src>
import jax
import jax.numpy as jnp
from jax.experimental import pallas as pl
from jax.experimental.pallas import tpu as pltpu


_NEG_BIG = -1e30  # padding value for logits: exp(_NEG_BIG - m) underflows to 0
_LANE = 128
_MAX_A_TILE = 4096  # lanes per grid step; 2 inputs * 5 chans * f32 * dbl-buf << 32 MiB


def rpn_loss_kernel(op_ref, ot_ref, cp_ref, ct_ref, out_ref,
                    m_sc, s_sc, tx_sc, t_sc, sl1_sc, cnt_sc):
    k = pl.program_id(0)

    @pl.when(k == 0)
    def _init():
        m_sc[...] = jnp.full(m_sc.shape, _NEG_BIG, m_sc.dtype)
        s_sc[...] = jnp.zeros(s_sc.shape, s_sc.dtype)
        tx_sc[...] = jnp.zeros(tx_sc.shape, tx_sc.dtype)
        t_sc[...] = jnp.zeros(t_sc.shape, t_sc.dtype)
        sl1_sc[...] = jnp.zeros(sl1_sc.shape, sl1_sc.dtype)
        cnt_sc[...] = jnp.zeros(cnt_sc.shape, cnt_sc.dtype)

    x = op_ref[...].astype(jnp.float32)   # (B, Ta) objectness logits
    t = ot_ref[...].astype(jnp.float32)   # (B, Ta) objectness targets

    # --- soft-label cross entropy partials (class axis = anchor axis) -------
    # CE_b = -sum_a t*(x - lse_b) = (sum_a t) * lse_b - sum_a t*x
    tile_max = jnp.max(x, axis=1, keepdims=True)              # (B, 1)
    new_m = jnp.maximum(m_sc[...], tile_max)
    s_sc[...] = (s_sc[...] * jnp.exp(m_sc[...] - new_m)
                 + jnp.sum(jnp.exp(x - new_m), axis=1, keepdims=True))
    m_sc[...] = new_m
    tx_sc[...] += jnp.sum(t * x, axis=1, keepdims=True)
    t_sc[...] += jnp.sum(t, axis=1, keepdims=True)

    # --- SmoothL1 (beta=1) on coords of positive anchors --------------------
    diff = cp_ref[...].astype(jnp.float32) - ct_ref[...].astype(jnp.float32)
    absd = jnp.abs(diff)
    per = jnp.where(absd < 1.0, 0.5 * diff * diff, absd - 0.5)  # (B, 4, Ta)
    per_a = jnp.sum(per, axis=1)                                # (B, Ta)
    mask = (t > 0.0).astype(jnp.float32)                        # (B, Ta)
    sl1_sc[...] += jnp.sum(per_a * mask, axis=1, keepdims=True)
    cnt_sc[...] += jnp.sum(mask, axis=1, keepdims=True)

    @pl.when(k == pl.num_programs(0) - 1)
    def _finalize():
        lse = m_sc[...] + jnp.log(s_sc[...])        # (B, 1)
        ce_b = t_sc[...] * lse - tx_sc[...]         # (B, 1)
        ce = jnp.sum(ce_b) / ce_b.shape[0]
        sl1_sum = jnp.sum(sl1_sc[...])
        n_pos = jnp.sum(cnt_sc[...])
        # NaN if no positive anchors -> matches PyTorch SmoothL1Loss on an
        # empty selection.
        coord = sl1_sum / (n_pos * 4.0)
        out_ref[0, 0] = ce + 10.0 * coord


def rpn_loss(pred, target, logger=None, n_iter=0):
    """Wrapper matching RPNLoss.forward (logger / n_iter are ignored)."""
    pred = jnp.asarray(pred)
    target = jnp.asarray(target)
    B, A, C = pred.shape

    # Lane-dense repack: anchor axis last; drop unused channel 1.
    obj_p = pred[:, :, 0]                                   # (B, A)
    obj_t = target[:, :, 0]                                 # (B, A)
    crd_p = jnp.transpose(pred[:, :, 2:6], (0, 2, 1))       # (B, 4, A)
    crd_t = jnp.transpose(target[:, :, 2:6], (0, 2, 1))     # (B, 4, A)

    a_tile = min(_MAX_A_TILE, ((A + _LANE - 1) // _LANE) * _LANE)
    a_pad = ((A + a_tile - 1) // a_tile) * a_tile
    pad = a_pad - A
    if pad:
        # Padded logits -> huge negative (vanishes in logsumexp);
        # padded targets/coords -> 0 (excluded from CE sums and positive mask).
        obj_p = jnp.pad(obj_p, ((0, 0), (0, pad)), constant_values=_NEG_BIG)
        obj_t = jnp.pad(obj_t, ((0, 0), (0, pad)))
        crd_p = jnp.pad(crd_p, ((0, 0), (0, 0), (0, pad)))
        crd_t = jnp.pad(crd_t, ((0, 0), (0, 0), (0, pad)))

    n_tiles = a_pad // a_tile

    grid_spec = pltpu.PrefetchScalarGridSpec(
        num_scalar_prefetch=0,
        grid=(n_tiles,),
        in_specs=[
            pl.BlockSpec((B, a_tile), lambda k: (0, k)),
            pl.BlockSpec((B, a_tile), lambda k: (0, k)),
            pl.BlockSpec((B, 4, a_tile), lambda k: (0, 0, k)),
            pl.BlockSpec((B, 4, a_tile), lambda k: (0, 0, k)),
        ],
        out_specs=pl.BlockSpec(memory_space=pltpu.MemorySpace.SMEM),
        scratch_shapes=[pltpu.VMEM((B, 1), jnp.float32)] * 6,
    )

    out = pl.pallas_call(
        rpn_loss_kernel,
        out_shape=jax.ShapeDtypeStruct((1, 1), jnp.float32),
        grid_spec=grid_spec,
        compiler_params=pltpu.CompilerParams(
            dimension_semantics=("arbitrary",),
            vmem_limit_bytes=32 * 1024 * 1024,
        ),
    )(obj_p, obj_t, crd_p, crd_t)
    return out[0, 0]


def rpn_loss_ref(pred, target):
    """Pure-JAX reference for validation."""
    pred = pred.astype(jnp.float32)
    target = target.astype(jnp.float32)
    obj_logit = pred[:, :, 0]
    obj_target = target[:, :, 0]
    log_sm = jax.nn.log_softmax(obj_logit, axis=1)
    ce = jnp.mean(-jnp.sum(obj_target * log_sm, axis=1))
    mask = (obj_target > 0.0).astype(jnp.float32)
    diff = pred[:, :, 2:6] - target[:, :, 2:6]
    absd = jnp.abs(diff)
    per_elem = jnp.where(absd < 1.0, 0.5 * diff * diff, absd - 0.5)
    sl1 = jnp.sum(per_elem * mask[:, :, None]) / (jnp.sum(mask) * 4.0)
    return ce + 10.0 * sl1


if __name__ == "__main__":
    key = jax.random.PRNGKey(0)
    B, A, C = 2, 64, 6  # batch, anchors, channels (0: objectness, 2:6 coords)
    kp, kt, km = jax.random.split(key, 3)

    pred = jax.random.normal(kp, (B, A, C), dtype=jnp.float32)
    target = jax.random.normal(kt, (B, A, C), dtype=jnp.float32)
    # objectness labels in {0, 1}; guarantee at least one positive anchor
    obj = (jax.random.uniform(km, (B, A)) > 0.5).astype(jnp.float32)
    obj = obj.at[0, 0].set(1.0)
    target = target.at[:, :, 0].set(obj)

    loss = rpn_loss(pred, target, logger=None, n_iter=0)
    jax.block_until_ready(loss)

    ref = rpn_loss_ref(pred, target)
    assert jnp.allclose(loss, ref, rtol=1e-5, atol=1e-5), (float(loss), float(ref))

    print("KERNEL_OK")
</pallas_src>

<mosaic_0001>
module attributes {stable_mosaic.version = 11 : i64} {
  func.func @rpn_loss_kernel(%arg0: i32, %arg1: memref<2x128xf32, #tpu.memory_space<vmem>>, %arg2: memref<2x128xf32, #tpu.memory_space<vmem>>, %arg3: memref<2x4x128xf32, #tpu.memory_space<vmem>>, %arg4: memref<2x4x128xf32, #tpu.memory_space<vmem>>, %arg5: memref<1x1xf32, #tpu.memory_space<smem>>, %arg6: memref<2x1xf32, #tpu.memory_space<vmem>>, %arg7: memref<2x1xf32, #tpu.memory_space<vmem>>, %arg8: memref<2x1xf32, #tpu.memory_space<vmem>>, %arg9: memref<2x1xf32, #tpu.memory_space<vmem>>, %arg10: memref<2x1xf32, #tpu.memory_space<vmem>>, %arg11: memref<2x1xf32, #tpu.memory_space<vmem>>) attributes {dimension_semantics = [#tpu.dimension_semantics<arbitrary>], iteration_bounds = array<i64: 1>, scalar_prefetch = 0 : i64, scratch_operands = 6 : i64, tpu.core_type = #tpu.core_type<tc>, window_params = [{transform_indices = @transform_0, window_bounds = array<i64: 2, 128>}, {transform_indices = @transform_1, window_bounds = array<i64: 2, 128>}, {transform_indices = @transform_2, window_bounds = array<i64: 2, 4, 128>}, {transform_indices = @transform_3, window_bounds = array<i64: 2, 4, 128>}, {transform_indices = @transform_4, window_bounds = array<i64: 1, 1>}]} {
    %c0_i32 = arith.constant 0 : i32
    %0 = arith.cmpi eq, %arg0, %c0_i32 : i32
    %1 = arith.extui %0 : i1 to i32
    %c0_i32_0 = arith.constant 0 : i32
    %2 = arith.cmpi ne, %1, %c0_i32_0 : i32
    scf.if %2 {
      %cst_48 = arith.constant -1.000000e+30 : f32
      %64 = vector.broadcast %cst_48 : f32 to vector<2x1xf32>
      %c0_49 = arith.constant 0 : index
      %c0_50 = arith.constant 0 : index
      %65 = vector.load %arg6[%c0_49, %c0_50] : memref<2x1xf32, #tpu.memory_space<vmem>>, vector<2x1xf32>
      tpu.vector_store %arg6[%c0_49, %c0_50], %64 {strides = array<i32>} : memref<2x1xf32, #tpu.memory_space<vmem>>, vector<2x1xf32>,
      %cst_51 = arith.constant 0.000000e+00 : f32
      %66 = vector.broadcast %cst_51 : f32 to vector<2x1xf32>
      %c0_52 = arith.constant 0 : index
      %c0_53 = arith.constant 0 : index
      %67 = vector.load %arg7[%c0_52, %c0_53] : memref<2x1xf32, #tpu.memory_space<vmem>>, vector<2x1xf32>
      tpu.vector_store %arg7[%c0_52, %c0_53], %66 {strides = array<i32>} : memref<2x1xf32, #tpu.memory_space<vmem>>, vector<2x1xf32>,
      %cst_54 = arith.constant 0.000000e+00 : f32
      %68 = vector.broadcast %cst_54 : f32 to vector<2x1xf32>
      %c0_55 = arith.constant 0 : index
      %c0_56 = arith.constant 0 : index
      %69 = vector.load %arg8[%c0_55, %c0_56] : memref<2x1xf32, #tpu.memory_space<vmem>>, vector<2x1xf32>
      tpu.vector_store %arg8[%c0_55, %c0_56], %68 {strides = array<i32>} : memref<2x1xf32, #tpu.memory_space<vmem>>, vector<2x1xf32>,
      %cst_57 = arith.constant 0.000000e+00 : f32
      %70 = vector.broadcast %cst_57 : f32 to vector<2x1xf32>
      %c0_58 = arith.constant 0 : index
      %c0_59 = arith.constant 0 : index
      %71 = vector.load %arg9[%c0_58, %c0_59] : memref<2x1xf32, #tpu.memory_space<vmem>>, vector<2x1xf32>
      tpu.vector_store %arg9[%c0_58, %c0_59], %70 {strides = array<i32>} : memref<2x1xf32, #tpu.memory_space<vmem>>, vector<2x1xf32>,
      %cst_60 = arith.constant 0.000000e+00 : f32
      %72 = vector.broadcast %cst_60 : f32 to vector<2x1xf32>
      %c0_61 = arith.constant 0 : index
      %c0_62 = arith.constant 0 : index
      %73 = vector.load %arg10[%c0_61, %c0_62] : memref<2x1xf32, #tpu.memory_space<vmem>>, vector<2x1xf32>
      tpu.vector_store %arg10[%c0_61, %c0_62], %72 {strides = array<i32>} : memref<2x1xf32, #tpu.memory_space<vmem>>, vector<2x1xf32>,
      %cst_63 = arith.constant 0.000000e+00 : f32
      %74 = vector.broadcast %cst_63 : f32 to vector<2x1xf32>
      %c0_64 = arith.constant 0 : index
      %c0_65 = arith.constant 0 : index
      %75 = vector.load %arg11[%c0_64, %c0_65] : memref<2x1xf32, #tpu.memory_space<vmem>>, vector<2x1xf32>
      tpu.vector_store %arg11[%c0_64, %c0_65], %74 {strides = array<i32>} : memref<2x1xf32, #tpu.memory_space<vmem>>, vector<2x1xf32>,
    } else {
    }
    %c0 = arith.constant 0 : index
    %c0_1 = arith.constant 0 : index
    %3 = vector.load %arg1[%c0, %c0_1] : memref<2x128xf32, #tpu.memory_space<vmem>>, vector<2x128xf32>
    %c0_2 = arith.constant 0 : index
    %c0_3 = arith.constant 0 : index
    %4 = vector.load %arg2[%c0_2, %c0_3] : memref<2x128xf32, #tpu.memory_space<vmem>>, vector<2x128xf32>
    %cst = arith.constant dense<0xFF800000> : vector<2xf32>
    %5 = vector.multi_reduction <maximumf>, %3, %cst [1] : vector<2x128xf32> to vector<2xf32>
    %6 = vector.shape_cast %5 : vector<2xf32> to vector<2x1xf32>
    %c0_4 = arith.constant 0 : index
    %c0_5 = arith.constant 0 : index
    %7 = vector.load %arg6[%c0_4, %c0_5] : memref<2x1xf32, #tpu.memory_space<vmem>>, vector<2x1xf32>
    %8 = arith.maximumf %7, %6 : vector<2x1xf32>
    %c0_6 = arith.constant 0 : index
    %c0_7 = arith.constant 0 : index
    %9 = vector.load %arg7[%c0_6, %c0_7] : memref<2x1xf32, #tpu.memory_space<vmem>>, vector<2x1xf32>
    %c0_8 = arith.constant 0 : index
    %c0_9 = arith.constant 0 : index
    %10 = vector.load %arg6[%c0_8, %c0_9] : memref<2x1xf32, #tpu.memory_space<vmem>>, vector<2x1xf32>
    %11 = arith.subf %10, %8 : vector<2x1xf32>
    %12 = math.exp %11 : vector<2x1xf32>
    %13 = arith.mulf %9, %12 : vector<2x1xf32>
    %14 = vector.broadcast %8 : vector<2x1xf32> to vector<2x128xf32>
    %15 = arith.subf %3, %14 : vector<2x128xf32>
    %16 = math.exp %15 : vector<2x128xf32>
    %cst_10 = arith.constant dense<0.000000e+00> : vector<2xf32>
    %17 = vector.multi_reduction <add>, %16, %cst_10 [1] : vector<2x128xf32> to vector<2xf32>
    %18 = vector.shape_cast %17 : vector<2xf32> to vector<2x1xf32>
    %19 = arith.addf %13, %18 : vector<2x1xf32>
    %c0_11 = arith.constant 0 : index
    %c0_12 = arith.constant 0 : index
    %20 = vector.load %arg7[%c0_11, %c0_12] : memref<2x1xf32, #tpu.memory_space<vmem>>, vector<2x1xf32>
    tpu.vector_store %arg7[%c0_11, %c0_12], %19 {strides = array<i32>} : memref<2x1xf32, #tpu.memory_space<vmem>>, vector<2x1xf32>,
    %c0_13 = arith.constant 0 : index
    %c0_14 = arith.constant 0 : index
    %21 = vector.load %arg6[%c0_13, %c0_14] : memref<2x1xf32, #tpu.memory_space<vmem>>, vector<2x1xf32>
    tpu.vector_store %arg6[%c0_13, %c0_14], %8 {strides = array<i32>} : memref<2x1xf32, #tpu.memory_space<vmem>>, vector<2x1xf32>,
    %c0_15 = arith.constant 0 : index
    %c0_16 = arith.constant 0 : index
    %22 = vector.load %arg8[%c0_15, %c0_16] : memref<2x1xf32, #tpu.memory_space<vmem>>, vector<2x1xf32>
    %23 = arith.mulf %4, %3 : vector<2x128xf32>
    %cst_17 = arith.constant dense<0.000000e+00> : vector<2xf32>
    %24 = vector.multi_reduction <add>, %23, %cst_17 [1] : vector<2x128xf32> to vector<2xf32>
    %25 = vector.shape_cast %24 : vector<2xf32> to vector<2x1xf32>
    %26 = arith.addf %22, %25 : vector<2x1xf32>
    %c0_18 = arith.constant 0 : index
    %c0_19 = arith.constant 0 : index
    %27 = vector.load %arg8[%c0_18, %c0_19] : memref<2x1xf32, #tpu.memory_space<vmem>>, vector<2x1xf32>
    tpu.vector_store %arg8[%c0_18, %c0_19], %26 {strides = array<i32>} : memref<2x1xf32, #tpu.memory_space<vmem>>, vector<2x1xf32>,
    %c0_20 = arith.constant 0 : index
    %c0_21 = arith.constant 0 : index
    %28 = vector.load %arg9[%c0_20, %c0_21] : memref<2x1xf32, #tpu.memory_space<vmem>>, vector<2x1xf32>
    %cst_22 = arith.constant dense<0.000000e+00> : vector<2xf32>
    %29 = vector.multi_reduction <add>, %4, %cst_22 [1] : vector<2x128xf32> to vector<2xf32>
    %30 = vector.shape_cast %29 : vector<2xf32> to vector<2x1xf32>
    %31 = arith.addf %28, %30 : vector<2x1xf32>
    %c0_23 = arith.constant 0 : index
    %c0_24 = arith.constant 0 : index
    %32 = vector.load %arg9[%c0_23, %c0_24] : memref<2x1xf32, #tpu.memory_space<vmem>>, vector<2x1xf32>
    tpu.vector_store %arg9[%c0_23, %c0_24], %31 {strides = array<i32>} : memref<2x1xf32, #tpu.memory_space<vmem>>, vector<2x1xf32>,
    %c0_25 = arith.constant 0 : index
    %c0_26 = arith.constant 0 : index
    %c0_27 = arith.constant 0 : index
    %33 = vector.load %arg3[%c0_25, %c0_26, %c0_27] : memref<2x4x128xf32, #tpu.memory_space<vmem>>, vector<2x4x128xf32>
    %c0_28 = arith.constant 0 : index
    %c0_29 = arith.constant 0 : index
    %c0_30 = arith.constant 0 : index
    %34 = vector.load %arg4[%c0_28, %c0_29, %c0_30] : memref<2x4x128xf32, #tpu.memory_space<vmem>>, vector<2x4x128xf32>
    %35 = arith.subf %33, %34 : vector<2x4x128xf32>
    %36 = math.absf %35 : vector<2x4x128xf32>
    %cst_31 = arith.constant 1.000000e+00 : f32
    %37 = vector.broadcast %cst_31 : f32 to vector<2x4x128xf32>
    %38 = arith.cmpf olt, %36, %37 : vector<2x4x128xf32>
    %cst_32 = arith.constant 5.000000e-01 : f32
    %39 = vector.broadcast %cst_32 : f32 to vector<2x4x128xf32>
    %40 = arith.mulf %39, %35 : vector<2x4x128xf32>
    %41 = arith.mulf %40, %35 : vector<2x4x128xf32>
    %cst_33 = arith.constant 5.000000e-01 : f32
    %42 = vector.broadcast %cst_33 : f32 to vector<2x4x128xf32>
    %43 = arith.subf %36, %42 : vector<2x4x128xf32>
    %44 = arith.select %38, %41, %43 : vector<2x4x128xi1>, vector<2x4x128xf32>
    %cst_34 = arith.constant dense<0.000000e+00> : vector<2x128xf32>
    %45 = vector.multi_reduction <add>, %44, %cst_34 [1] : vector<2x4x128xf32> to vector<2x128xf32>
    %cst_35 = arith.constant 0.000000e+00 : f32
    %46 = vector.broadcast %cst_35 : f32 to vector<2x128xf32>
    %47 = arith.cmpf ogt, %4, %46 : vector<2x128xf32>
    %48 = arith.extui %47 : vector<2x128xi1> to vector<2x128xi32>
    %49 = arith.sitofp %48 : vector<2x128xi32> to vector<2x128xf32>
    %c0_36 = arith.constant 0 : index
    %c0_37 = arith.constant 0 : index
    %50 = vector.load %arg10[%c0_36, %c0_37] : memref<2x1xf32, #tpu.memory_space<vmem>>, vector<2x1xf32>
    %51 = arith.mulf %45, %49 : vector<2x128xf32>
    %cst_38 = arith.constant dense<0.000000e+00> : vector<2xf32>
    %52 = vector.multi_reduction <add>, %51, %cst_38 [1] : vector<2x128xf32> to vector<2xf32>
    %53 = vector.shape_cast %52 : vector<2xf32> to vector<2x1xf32>
    %54 = arith.addf %50, %53 : vector<2x1xf32>
    %c0_39 = arith.constant 0 : index
    %c0_40 = arith.constant 0 : index
    %55 = vector.load %arg10[%c0_39, %c0_40] : memref<2x1xf32, #tpu.memory_space<vmem>>, vector<2x1xf32>
    tpu.vector_store %arg10[%c0_39, %c0_40], %54 {strides = array<i32>} : memref<2x1xf32, #tpu.memory_space<vmem>>, vector<2x1xf32>,
    %c0_41 = arith.constant 0 : index
    %c0_42 = arith.constant 0 : index
    %56 = vector.load %arg11[%c0_41, %c0_42] : memref<2x1xf32, #tpu.memory_space<vmem>>, vector<2x1xf32>
    %cst_43 = arith.constant dense<0.000000e+00> : vector<2xf32>
    %57 = vector.multi_reduction <add>, %49, %cst_43 [1] : vector<2x128xf32> to vector<2xf32>
    %58 = vector.shape_cast %57 : vector<2xf32> to vector<2x1xf32>
    %59 = arith.addf %56, %58 : vector<2x1xf32>
    %c0_44 = arith.constant 0 : index
    %c0_45 = arith.constant 0 : index
    %60 = vector.load %arg11[%c0_44, %c0_45] : memref<2x1xf32, #tpu.memory_space<vmem>>, vector<2x1xf32>
    tpu.vector_store %arg11[%c0_44, %c0_45], %59 {strides = array<i32>} : memref<2x1xf32, #tpu.memory_space<vmem>>, vector<2x1xf32>,
    %c0_i32_46 = arith.constant 0 : i32
    %61 = arith.cmpi eq, %arg0, %c0_i32_46 : i32
    %62 = arith.extui %61 : i1 to i32
    %c0_i32_47 = arith.constant 0 : i32
    %63 = arith.cmpi ne, %62, %c0_i32_47 : i32
    scf.if %63 {
      %c0_48 = arith.constant 0 : index
      %c0_49 = arith.constant 0 : index
      %64 = vector.load %arg6[%c0_48, %c0_49] : memref<2x1xf32, #tpu.memory_space<vmem>>, vector<2x1xf32>
      %c0_50 = arith.constant 0 : index
      %c0_51 = arith.constant 0 : index
      %65 = vector.load %arg7[%c0_50, %c0_51] : memref<2x1xf32, #tpu.memory_space<vmem>>, vector<2x1xf32>
      %66 = math.log %65 : vector<2x1xf32>
      %67 = arith.addf %64, %66 : vector<2x1xf32>
      %c0_52 = arith.constant 0 : index
      %c0_53 = arith.constant 0 : index
      %68 = vector.load %arg9[%c0_52, %c0_53] : memref<2x1xf32, #tpu.memory_space<vmem>>, vector<2x1xf32>
      %69 = arith.mulf %68, %67 : vector<2x1xf32>
      %c0_54 = arith.constant 0 : index
      %c0_55 = arith.constant 0 : index
      %70 = vector.load %arg8[%c0_54, %c0_55] : memref<2x1xf32, #tpu.memory_space<vmem>>, vector<2x1xf32>
      %71 = arith.subf %69, %70 : vector<2x1xf32>
      %72 = vector.shape_cast %71 : vector<2x1xf32> to vector<1x2x1xf32>
      %cst_56 = arith.constant dense<0.000000e+00> : vector<1xf32>
      %73 = vector.multi_reduction <add>, %72, %cst_56 [1, 2] : vector<1x2x1xf32> to vector<1xf32>
      %74 = vector.shape_cast %73 : vector<1xf32> to vector<1x1x1xf32>
      %75 = vector.extract %74[0, 0, 0] : f32 from vector<1x1x1xf32>
      %cst_57 = arith.constant 2.000000e+00 : f32
      %76 = arith.divf %75, %cst_57 : f32
      %c0_58 = arith.constant 0 : index
      %c0_59 = arith.constant 0 : index
      %77 = vector.load %arg10[%c0_58, %c0_59] : memref<2x1xf32, #tpu.memory_space<vmem>>, vector<2x1xf32>
      %78 = vector.shape_cast %77 : vector<2x1xf32> to vector<1x2x1xf32>
      %cst_60 = arith.constant dense<0.000000e+00> : vector<1xf32>
      %79 = vector.multi_reduction <add>, %78, %cst_60 [1, 2] : vector<1x2x1xf32> to vector<1xf32>
      %80 = vector.shape_cast %79 : vector<1xf32> to vector<1x1x1xf32>
      %81 = vector.extract %80[0, 0, 0] : f32 from vector<1x1x1xf32>
      %c0_61 = arith.constant 0 : index
      %c0_62 = arith.constant 0 : index
      %82 = vector.load %arg11[%c0_61, %c0_62] : memref<2x1xf32, #tpu.memory_space<vmem>>, vector<2x1xf32>
      %83 = vector.shape_cast %82 : vector<2x1xf32> to vector<1x2x1xf32>
      %cst_63 = arith.constant dense<0.000000e+00> : vector<1xf32>
      %84 = vector.multi_reduction <add>, %83, %cst_63 [1, 2] : vector<1x2x1xf32> to vector<1xf32>
      %85 = vector.shape_cast %84 : vector<1xf32> to vector<1x1x1xf32>
      %86 = vector.extract %85[0, 0, 0] : f32 from vector<1x1x1xf32>
      %cst_64 = arith.constant 4.000000e+00 : f32
      %87 = arith.mulf %86, %cst_64 : f32
      %88 = arith.divf %81, %87 : f32
      %cst_65 = arith.constant 1.000000e+01 : f32
      %89 = arith.mulf %cst_65, %88 : f32
      %90 = arith.addf %76, %89 : f32
      %c0_66 = arith.constant 0 : index
      %c0_67 = arith.constant 0 : index
      %91 = memref.load %arg5[%c0_66, %c0_67] : memref<1x1xf32, #tpu.memory_space<smem>>
      memref.store %90, %arg5[%c0_66, %c0_67] : memref<1x1xf32, #tpu.memory_space<smem>>
    } else {
    }
    return
  }
  func.func @transform_0(%arg0: i32) -> (i32, i32) {
    %c0_i32 = arith.constant 0 : i32
    %c0_i32_0 = arith.constant 0 : i32
    return %c0_i32, %arg0 : i32, i32
  }
  func.func @transform_1(%arg0: i32) -> (i32, i32) {
    %c0_i32 = arith.constant 0 : i32
    %c0_i32_0 = arith.constant 0 : i32
    return %c0_i32, %arg0 : i32, i32
  }
  func.func @transform_2(%arg0: i32) -> (i32, i32, i32) {
    %c0_i32 = arith.constant 0 : i32
    %c0_i32_0 = arith.constant 0 : i32
    %c0_i32_1 = arith.constant 0 : i32
    return %c0_i32, %c0_i32_0, %arg0 : i32, i32, i32
  }
  func.func @transform_3(%arg0: i32) -> (i32, i32, i32) {
    %c0_i32 = arith.constant 0 : i32
    %c0_i32_0 = arith.constant 0 : i32
    %c0_i32_1 = arith.constant 0 : i32
    return %c0_i32, %c0_i32_0, %arg0 : i32, i32, i32
  }
  func.func @transform_4(%arg0: i32) -> (i32, i32) {
    %c0_i32 = arith.constant 0 : i32
    %c0_i32_0 = arith.constant 0 : i32
    %c0_i32_1 = arith.constant 0 : i32
    return %c0_i32, %c0_i32_0 : i32, i32
  }
}

</mosaic_0001>

<llo_original>
// kernel: tpu_custom_call.1
$region0: #{tpu_custom_call.1}
  #allocation0 [shape = 'u32[]', space=smem, size = 0x4, offset = 0x4, fixed_abs, tag = 'smem constant byte address 0x4 - core index']
  #allocation1 [shape = 'u32[144,128]{1,0:T(1,128)}', space=vmem, size = 0x12000, scoped, tag = 'internal scratch']
  #allocation2 [shape = 'f32[2,1]{1,0:T(2,128)}', space=vmem, size = 0x400, scoped, tag = 'scratch operand']
  #allocation3 [shape = 'f32[2,1]{1,0:T(2,128)}', space=vmem, size = 0x400, scoped, tag = 'scratch operand']
  #allocation4 [shape = 'f32[2,1]{1,0:T(2,128)}', space=vmem, size = 0x400, scoped, tag = 'scratch operand']
  #allocation5 [shape = 'f32[2,1]{1,0:T(2,128)}', space=vmem, size = 0x400, scoped, tag = 'scratch operand']
  #allocation6 [shape = 'f32[2,1]{1,0:T(2,128)}', space=vmem, size = 0x400, scoped, tag = 'scratch operand']
  #allocation7 [shape = 'f32[2,1]{1,0:T(2,128)}', space=vmem, size = 0x400, scoped, tag = 'scratch operand']
  %s0 = inlined_call_operand.hbm [shape: f32[2,128], index: 0, kind: input, shape index: {}]
  %s1 = inlined_call_operand.vmem [shape: f32[2,128], index: 1, kind: input, shape index: {}]
  %s2 = inlined_call_operand.hbm [shape: f32[2,4,128], index: 2, kind: input, shape index: {}]
  %s3 = inlined_call_operand.vmem [shape: f32[2,4,128], index: 3, kind: input, shape index: {}]
  %s4 = inlined_call_operand.hbm [shape: f32[1,1], index: 4, kind: output, shape index: {}]
  %s5 = sld [smem:[#allocation0]]
  $region42: #{tpu_custom_call.1} parent=0
    _
  %s7 = ssub.s32 1, %s5
  %s8 = scalar_select 0, %s7, %s5
  $region1: #{tpu_custom_call.1} parent=0
    #allocation8 [shape = 'u8[1024]{0}', space=vmem, size = 0x400, scoped, tag = 'input window, operand 0, single buffered']
    #allocation9 [shape = 's32[1]{0}', space=sflag, size = 0x4, scoped, tag = 'scoped memory for tpu_custom_call.1']
    #allocation10 [shape = 's32[1]{0}', space=sflag, size = 0x4, scoped, tag = 'scoped memory for tpu_custom_call.1']
    #allocation11 [shape = 'u8[4096]{0}', space=vmem, size = 0x1000, scoped, tag = 'input window, operand 2, single buffered']
    #allocation12 [shape = 's32[1]{0}', space=sflag, size = 0x4, scoped, tag = 'scoped memory for tpu_custom_call.1']
    #allocation13 [shape = 'u8[512]{0}', space=smem, size = 0x200, scoped, tag = 'output window, operand 0, single buffered']
    %9 = vsyncpa [#allocation9], 0
    %10 = vsyncpa [#allocation12], 0
    %11 = vsyncpa [#allocation10], 0
    // Predicated region
    $region2: #{tpu_custom_call.1} parent=1 // pred_check
      _
    $region3: #{tpu_custom_call.1} parent=1 // pred_check_branch
      %13 = sbr.rel (0) target = $region5
    $region4: #{tpu_custom_call.1} parent=1 // pred_region
      %s15 = ssub.s32 32, 32
      %16 = vsyncadd [#allocation9], %s15
      %s18 = sshll.u32 [#allocation8], 4
      %s19 = int_to_ptr.vmem [resolvable:$true] %s18
      %21 = dma.hbm_to_vmem [thread:$0]  %s0, 32, %s19, [#allocation9]
    $region5: #{tpu_custom_call.1} parent=1 // pred_fallthru
      _
    // Predicated region
    $region6: #{tpu_custom_call.1} parent=1 // pred_check
      _
    $region7: #{tpu_custom_call.1} parent=1 // pred_check_branch
      %23 = sbr.rel (0) target = $region9
    $region8: #{tpu_custom_call.1} parent=1 // pred_region
      _
    $region9: #{tpu_custom_call.1} parent=1 // pred_fallthru
      _
    // Predicated region
    $region10: #{tpu_custom_call.1} parent=1 // pred_check
      _
    $region11: #{tpu_custom_call.1} parent=1 // pred_check_branch
      %25 = sbr.rel (0) target = $region13
    $region12: #{tpu_custom_call.1} parent=1 // pred_region
      %s27 = ssub.s32 128, 128
      %28 = vsyncadd [#allocation12], %s27
      %s29 = sshll.u32 [#allocation11], 4
      %s30 = int_to_ptr.vmem [resolvable:$true] %s29
      %35 = dma.hbm_to_vmem [thread:$0]  %s2, 128, %s30, [#allocation12], 64, 64, 4
    $region13: #{tpu_custom_call.1} parent=1 // pred_fallthru
      _
    // Predicated region
    $region14: #{tpu_custom_call.1} parent=1 // pred_check
      _
    $region15: #{tpu_custom_call.1} parent=1 // pred_check_branch
      %37 = sbr.rel (0) target = $region17
    $region16: #{tpu_custom_call.1} parent=1 // pred_region
      _
    $region17: #{tpu_custom_call.1} parent=1 // pred_fallthru
      _
    // Predicated region
    $region18: #{tpu_custom_call.1} parent=1 // pred_check
      _
    $region19: #{tpu_custom_call.1} parent=1 // pred_check_branch
      %39 = sbr.rel (0) target = $region21
    $region20: #{tpu_custom_call.1} parent=1 // pred_region
      %40 = dma.done [#allocation9], 32
    $region21: #{tpu_custom_call.1} parent=1 // pred_fallthru
      _
    // Predicated region
    $region22: #{tpu_custom_call.1} parent=1 // pred_check
      _
    $region23: #{tpu_custom_call.1} parent=1 // pred_check_branch
      %42 = sbr.rel (0) target = $region25
    $region24: #{tpu_custom_call.1} parent=1 // pred_region
      %43 = dma.done [#allocation12], 128
    $region25: #{tpu_custom_call.1} parent=1 // pred_fallthru
      _
    %p44 = scmp.eq.s32.totalorder 0, 0
    // Predicated region
    $region26: #{tpu_custom_call.1} parent=1 // pred_check
      %p45 = pneg %p44
    $region27: #{tpu_custom_call.1} parent=1 // pred_check_branch
      %47 = sbr.rel (%p45) target = $region29
    $region28: #{tpu_custom_call.1} parent=1 // pred_region
      %vm48 = vcmask 1024
      %49 = vst.msk [vmem:[#allocation2] sm:$0x3] %vm48, -1e+30
      %50 = vst.msk [vmem:[#allocation3] sm:$0x3] %vm48, 0.0
      %51 = vst.msk [vmem:[#allocation4] sm:$0x3] %vm48, 0.0
      %52 = vst.msk [vmem:[#allocation5] sm:$0x3] %vm48, 0.0
      %53 = vst.msk [vmem:[#allocation6] sm:$0x3] %vm48, 0.0
      %54 = vst.msk [vmem:[#allocation7] sm:$0x3] %vm48, 0.0
    $region29: #{tpu_custom_call.1} parent=1 // pred_fallthru
      _
    %v55 = vld [vmem:[#allocation8] sm:$0x3]
    %v56 = vld [vmem:[%s1] sm:$0x3]
    %vm57 = vcmask 1041408
    %v58 = vsel %vm57, %v55, -inf
    %59 = vmax.xlane.f32.xlu0 %v58
    %v60 = vpop.xlane.xlu0 %59
    %v61 = vld [vmem:[#allocation2] sm:$0x3]
    %v62 = vmax.f32 %v61, %v60
    %v63 = vld [vmem:[#allocation3] sm:$0x3]
    %v64 = vsub.f32 %v61, %v62
    %v65 = vmul.f32 %v64, 1.442695
    %v66 = vpow.pop %v65
    %v67 = vmul.f32 %v63, %v66
    %69 = vset.pattern.permute.xlu0 0
    %70 = vperm.xlu0 %69, %v62
    %v71 = vpop.permute.xlu0 %70
    %v73 = vsub.f32 %v55, %v71
    %v74 = vmul.f32 %v73, 1.442695
    %v75 = vpow.pop %v74
    %v76 = vsel %vm57, %v75, 0.0
    %77 = vadd.xlane.f32.xlu0 %v76
    %v78 = vpop.xlane.xlu0 %77
    %v79 = vadd.f32 %v67, %v78
    %vm80 = vcmask 1024
    %81 = vst.msk [vmem:[#allocation3] sm:$0x3] %vm80, %v79
    %82 = vst.msk [vmem:[#allocation2] sm:$0x3] %vm80, %v62
    %v83 = vld [vmem:[#allocation4] sm:$0x3]
    %v84 = vmul.f32 %v56, %v55
    %v85 = vsel %vm57, %v84, 0.0
    %86 = vadd.xlane.f32.xlu0 %v85
    %v87 = vpop.xlane.xlu0 %86
    %v88 = vadd.f32 %v83, %v87
    %89 = vst.msk [vmem:[#allocation4] sm:$0x3] %vm80, %v88
    %v90 = vld [vmem:[#allocation5] sm:$0x3]
    %v91 = vsel %vm57, %v56, 0.0
    %92 = vadd.xlane.f32.xlu0 %v91
    %v93 = vpop.xlane.xlu0 %92
    %v94 = vadd.f32 %v90, %v93
    %95 = vst.msk [vmem:[#allocation5] sm:$0x3] %vm80, %v94
    %v96 = vld [vmem:[#allocation11] sm:$0xf]
    %v97 = vld [vmem:[#allocation11 + $0x4] sm:$0xf]
    %v98 = vld [vmem:[%s3] sm:$0xf]
    %v99 = vld [vmem:[%s3 + $0x4] sm:$0xf]
    %v100 = vsub.f32 %v96, %v98
    %v101 = vsub.f32 %v97, %v99
    %v102 = vand.u32 2147483647, %v100
    %v103 = vand.u32 2147483647, %v101
    %vm104 = vcmp.lt.f32.partialorder %v102, 1.0
    %vm105 = vcmp.lt.f32.partialorder %v103, 1.0
    %v106 = vmul.f32 %v100, 0.5
    %v107 = vmul.f32 %v101, 0.5
    %v108 = vmul.f32 %v106, %v100
    %v109 = vmul.f32 %v107, %v101
    %v110 = vsub.f32 %v102, 0.5
    %v111 = vsub.f32 %v103, 0.5
    %v112 = vsel %vm104, %v108, %v110
    %v113 = vsel %vm105, %v109, %v111
    %vm114 = vcmask 1043456
    %v115 = vsel %vm114, %v112, 0.0
    %v116 = vrot.slane %v115, 4
    %v117 = vadd.f32 %v115, %v116
    %v118 = vrot.slane %v117, 2
    %v119 = vadd.f32 %v117, %v118
    %v120 = vrot.slane %v119, 1
    %v121 = vadd.f32 %v119, %v120
    %v122 = vsel %vm114, %v113, 0.0
    %v123 = vrot.slane %v122, 4
    %v124 = vadd.f32 %v122, %v123
    %v125 = vrot.slane %v124, 2
    %v126 = vadd.f32 %v124, %v125
    %v127 = vrot.slane %v126, 1
    %v128 = vadd.f32 %v126, %v127
    %vm129 = vcmp.gt.f32.partialorder %v56, 0.0
    %v130 = vsel %vm129, 1, 0
    %v131 = vcvt.s32.f32 %v130
    %v132 = vld [vmem:[#allocation6] sm:$0x3]
    %v134 = vrot.slane %v131, 1
    %v137 = vmul.f32 %v121, %v131
    %v138 = vmul.f32 %v128, %v134
    %v141 = vrot.slane %v138, 7
    %vm142 = vcmask 1041409
    %v143 = vsel %vm142, %v141, %v137
    %v145 = vsel %vm57, %v143, 0.0
    %146 = vadd.xlane.f32.xlu0 %v145
    %v147 = vpop.xlane.xlu0 %146
    %v148 = vadd.f32 %v132, %v147
    %149 = vst.msk [vmem:[#allocation6] sm:$0x3] %vm80, %v148
    %v150 = vld [vmem:[#allocation7] sm:$0x3]
    %v151 = vsel %vm57, %v131, 0.0
    %152 = vadd.xlane.f32.xlu0 %v151
    %v153 = vpop.xlane.xlu0 %152
    %v154 = vadd.f32 %v150, %v153
    %155 = vst.msk [vmem:[#allocation7] sm:$0x3] %vm80, %v154
    // Predicated region
    $region30: #{tpu_custom_call.1} parent=1 // pred_check
      %p156 = pneg %p44
    $region31: #{tpu_custom_call.1} parent=1 // pred_check_branch
      %158 = sbr.rel (%p156) target = $region33
    $region32: #{tpu_custom_call.1} parent=1 // pred_region
      %v159 = vld [vmem:[#allocation2] sm:$0x3]
      %v160 = vld [vmem:[#allocation3] sm:$0x3]
      %v161 = vlog2.pop %v160
      %v162 = vmul.f32 %v161, 0.6931472
      %v163 = vadd.f32 %v159, %v162
      %v164 = vld [vmem:[#allocation5] sm:$0x3]
      %v165 = vmul.f32 %v164, %v163
      %v166 = vld [vmem:[#allocation4] sm:$0x3]
      %v167 = vsub.f32 %v165, %v166
      %v168 = vsel %vm80, %v167, 0.0
      %169 = vadd.xlane.f32.xlu0 %v168
      %v170 = vpop.xlane.xlu0 %169
      %v171 = vrot.slane %v170, 4
      %v172 = vadd.f32 %v170, %v171
      %v173 = vrot.slane %v172, 2
      %v174 = vadd.f32 %v172, %v173
      %v175 = vrot.slane %v174, 1
      %v176 = vadd.f32 %v174, %v175
      %s177 = vtos %v176
      %v178 = vrcp.pop 2.0
      %s179 = vtos %v178
      %s180 = smul.f32 %s177, %s179
      %v181 = vld [vmem:[#allocation6] sm:$0x3]
      %v182 = vsel %vm80, %v181, 0.0
      %183 = vadd.xlane.f32.xlu0 %v182
      %v184 = vpop.xlane.xlu0 %183
      %v185 = vrot.slane %v184, 4
      %v186 = vadd.f32 %v184, %v185
      %v187 = vrot.slane %v186, 2
      %v188 = vadd.f32 %v186, %v187
      %v189 = vrot.slane %v188, 1
      %v190 = vadd.f32 %v188, %v189
      %s191 = vtos %v190
      %v192 = vld [vmem:[#allocation7] sm:$0x3]
      %v193 = vsel %vm80, %v192, 0.0
      %194 = vadd.xlane.f32.xlu0 %v193
      %v195 = vpop.xlane.xlu0 %194
      %v196 = vrot.slane %v195, 4
      %v197 = vadd.f32 %v195, %v196
      %v198 = vrot.slane %v197, 2
      %v199 = vadd.f32 %v197, %v198
      %v200 = vrot.slane %v199, 1
      %v201 = vadd.f32 %v199, %v200
      %s202 = vtos %v201
      %s203 = smul.f32 %s202, 4.0
      %v204 = vstv %s203
      %v205 = vrcp.pop %v204
      %s206 = vtos %v205
      %s207 = smul.f32 %s191, %s206
      %s208 = smul.f32 %s207, 10.0
      %s209 = sadd.f32 %s180, %s208
      %s210 = scalar_lea.smem [#allocation13], 0
      %211 = sst [smem:[%s210]] %s209
    $region33: #{tpu_custom_call.1} parent=1 // pred_fallthru
      _
    // Predicated region
    $region34: #{tpu_custom_call.1} parent=1 // pred_check
      _
    $region35: #{tpu_custom_call.1} parent=1 // pred_check_branch
      %213 = sbr.rel (0) target = $region37
    $region36: #{tpu_custom_call.1} parent=1 // pred_region
      %s215 = ssub.s32 16, 16
      %216 = vsyncadd [#allocation10], %s215
      %219 = dma.smem_to_hbm [#allocation13], 16, %s4, [#allocation10]
    $region37: #{tpu_custom_call.1} parent=1 // pred_fallthru
      _
    // Predicated region
    $region38: #{tpu_custom_call.1} parent=1 // pred_check
      _
    $region39: #{tpu_custom_call.1} parent=1 // pred_check_branch
      %221 = sbr.rel (0) target = $region41
    $region40: #{tpu_custom_call.1} parent=1 // pred_region
      %222 = dma.done [#allocation10], 16
    $region41: #{tpu_custom_call.1} parent=1 // pred_fallthru
      _
    %223 = sfence
    %224 = vsyncpa [#allocation9], 1
    %225 = vsyncpa [#allocation12], 1
    %226 = vsyncpa [#allocation10], 1

</llo_original>
